<compile_context>
chip_gen: v7x
topology: tpu7x:2x2x1
jax: 0.10.0
libtpu: 0.0.40
codegen_flags: <defaults>
</compile_context>

<pallas_src>
import math
import functools

import jax
import jax.numpy as jnp
from jax import lax
from jax.experimental import pallas as pl
from jax.experimental.pallas import tpu as pltpu


_VMEM_LIMIT = 32 * 1024 * 1024      # safe on v5e/v6e (128 MiB) and v7x (64 MiB)
_NEG_INF = -1e30                    # large finite "minus infinity" for masking


def _pick_tile(dim, candidates):
    """Largest candidate tile that evenly divides `dim`; else the full dim."""
    for c in candidates:
        if dim % c == 0:
            return c
    return dim


# ----------------------------------------------------------------------------
# Kernel 1: tiled linear layer  y = x @ W + b
#   grid = (M/tm, N/tn, K/tk), f32 accumulator scratch, init/finalize on K.
# ----------------------------------------------------------------------------
def _linear_kernel(x_ref, w_ref, b_ref, o_ref, acc_ref):
    k_idx = pl.program_id(2)

    @pl.when(k_idx == 0)
    def _init():
        acc_ref[...] = jnp.zeros(acc_ref.shape, acc_ref.dtype)

    acc_ref[...] += jnp.dot(x_ref[...], w_ref[...],
                            preferred_element_type=jnp.float32)

    @pl.when(k_idx == pl.num_programs(2) - 1)
    def _finalize():
        o_ref[...] = (acc_ref[...] + b_ref[...]).astype(o_ref.dtype)


def linear_pallas(x2d, w, b):
    """x2d: (M, K) f32, w: (K, N) f32, b: (1, N) f32  ->  (M, N) f32."""
    M, K = x2d.shape
    N = w.shape[1]
    tm = _pick_tile(M, (256, 128))
    tn = _pick_tile(N, (512, 256, 128))
    tk = _pick_tile(K, (512, 256, 128))
    grid = (M // tm, N // tn, K // tk)

    return pl.pallas_call(
        _linear_kernel,
        out_shape=jax.ShapeDtypeStruct((M, N), x2d.dtype),
        grid=grid,
        in_specs=[
            pl.BlockSpec((tm, tk), lambda i, j, k: (i, k)),
            pl.BlockSpec((tk, tn), lambda i, j, k: (k, j)),
            pl.BlockSpec((1, tn), lambda i, j, k: (0, j)),
        ],
        out_specs=pl.BlockSpec((tm, tn), lambda i, j, k: (i, j)),
        scratch_shapes=[pltpu.VMEM((tm, tn), jnp.float32)],
        compiler_params=pltpu.CompilerParams(
            dimension_semantics=("parallel", "parallel", "arbitrary"),
            vmem_limit_bytes=_VMEM_LIMIT),
    )(x2d, w, b)


# ----------------------------------------------------------------------------
# Kernel 2: flash-style attention (online softmax), all heads per grid step.
#   grid = (B, S/tq, S/tkv); scratch m/l/acc persist across the kv axis.
# ----------------------------------------------------------------------------
def _flash_attention_kernel(q_ref, k_ref, v_ref, bias_ref, o_ref,
                            m_scr, l_scr, acc_scr, *, scale):
    kv_idx = pl.program_id(2)

    @pl.when(kv_idx == 0)
    def _init():
        m_scr[...] = jnp.full(m_scr.shape, -jnp.inf, m_scr.dtype)
        l_scr[...] = jnp.zeros(l_scr.shape, l_scr.dtype)
        acc_scr[...] = jnp.zeros(acc_scr.shape, acc_scr.dtype)

    q = q_ref[...] * scale       # (H, tq, d_k); scaling q is cheaper than scaling s
    k = k_ref[...]               # (H, tkv, d_k)
    v = v_ref[...]               # (H, tkv, d_k)
    bias = bias_ref[...]         # (1 | tq, tkv) additive mask bias

    # scores[h] = q[h] @ k[h]^T -- contract the last dims (no K transpose copy).
    s = lax.dot_general(q, k, (((2,), (2,)), ((0,), (0,))),
                        preferred_element_type=jnp.float32)      # (H, tq, tkv)
    s = s + bias[None, :, :]

    m_prev = m_scr[...]                                          # (H, tq, 1)
    m_new = jnp.maximum(m_prev, jnp.max(s, axis=-1, keepdims=True))
    alpha = jnp.exp(m_prev - m_new)
    p = jnp.exp(s - m_new)                                       # (H, tq, tkv)
    l_scr[...] = alpha * l_scr[...] + jnp.sum(p, axis=-1, keepdims=True)
    acc_scr[...] = alpha * acc_scr[...] + lax.dot_general(
        p, v, (((2,), (1,)), ((0,), (0,))),
        preferred_element_type=jnp.float32)                      # (H, tq, d_k)
    m_scr[...] = m_new

    @pl.when(kv_idx == pl.num_programs(2) - 1)
    def _finalize():
        inv_l = pl.reciprocal(l_scr[...], approx=True)           # EUP slot
        o_ref[...] = (acc_scr[...] * inv_l).astype(o_ref.dtype)


def flash_attention_pallas(q4, k4, v4, bias):
    """q4/k4/v4: (B, H, S, d_k) f32; bias: (B, Sm, S) f32 additive mask, Sm in {1, S}."""
    B, H, S, d_k = q4.shape
    Sm = bias.shape[1]
    tq = _pick_tile(S, (128,))
    tkv = _pick_tile(S, (128,))
    grid = (B, S // tq, S // tkv)

    def qkv_block(t):
        return (pl.Squeezed(), H, t, d_k)

    if Sm == 1:
        bias_spec = pl.BlockSpec((pl.Squeezed(), 1, tkv),
                                 lambda b, qi, ki: (b, 0, ki))
    else:
        bias_spec = pl.BlockSpec((pl.Squeezed(), tq, tkv),
                                 lambda b, qi, ki: (b, qi, ki))

    kernel = functools.partial(_flash_attention_kernel,
                               scale=1.0 / math.sqrt(d_k))
    return pl.pallas_call(
        kernel,
        out_shape=jax.ShapeDtypeStruct((B, H, S, d_k), q4.dtype),
        grid=grid,
        in_specs=[
            pl.BlockSpec(qkv_block(tq), lambda b, qi, ki: (b, 0, qi, 0)),
            pl.BlockSpec(qkv_block(tkv), lambda b, qi, ki: (b, 0, ki, 0)),
            pl.BlockSpec(qkv_block(tkv), lambda b, qi, ki: (b, 0, ki, 0)),
            bias_spec,
        ],
        out_specs=pl.BlockSpec(qkv_block(tq), lambda b, qi, ki: (b, 0, qi, 0)),
        scratch_shapes=[
            pltpu.VMEM((H, tq, 1), jnp.float32),     # running row max
            pltpu.VMEM((H, tq, 1), jnp.float32),     # running denominator
            pltpu.VMEM((H, tq, d_k), jnp.float32),   # running output accumulator
        ],
        compiler_params=pltpu.CompilerParams(
            dimension_semantics=("parallel", "parallel", "arbitrary"),
            vmem_limit_bytes=_VMEM_LIMIT),
    )(q4, k4, v4, bias)


# ----------------------------------------------------------------------------
# Module wrapper
# ----------------------------------------------------------------------------
class MultiHeadAttentionPallas:
    def __init__(self, d_model: int, num_heads: int, dropout: float, key):
        assert d_model % num_heads == 0, 'd_model is not divisible by h'
        self.d_model = d_model
        self.num_heads = num_heads
        self.d_k = d_model // num_heads
        self.dropout = dropout  # TODO(synk): dropout is identity (eval mode)

        # Deterministic init matching nn.Linear's U(-1/sqrt(in), 1/sqrt(in)).
        bound = 1.0 / math.sqrt(d_model)
        keys = jax.random.split(key, 8)

        def init_linear(kw, kb):
            w = jax.random.uniform(kw, (d_model, d_model), jnp.float32,
                                   -bound, bound)          # stored as (in, out)
            b = jax.random.uniform(kb, (1, d_model), jnp.float32, -bound, bound)
            return w, b

        self.wq, self.bq = init_linear(keys[0], keys[1])
        self.wk, self.bk = init_linear(keys[2], keys[3])
        self.wv, self.bv = init_linear(keys[4], keys[5])
        self.wo, self.bo = init_linear(keys[6], keys[7])

        # Fused QKV weights for the self-attention fast path (x read once).
        self.w_qkv = jnp.concatenate([self.wq, self.wk, self.wv], axis=1)
        self.b_qkv = jnp.concatenate([self.bq, self.bk, self.bv], axis=1)

    def _to_4d(self, x, B, S):
        # (B, S, d_model) -> (B, H, S, d_k)
        # TODO(synk): head-slicing via the attention BlockSpec index_map would
        # remove this HBM transpose, but a 1-wide sublane block on the head
        # axis is fragile for small d_k; kept as an XLA transpose.
        return x.reshape(B, S, self.num_heads, self.d_k).transpose(0, 2, 1, 3)

    def __call__(self, q, k, v, mask=None):
        B, S, D = q.shape

        if (q is k) and (k is v):
            # Self-attention: single fused projection with the (D, 3D) weight.
            qkv = linear_pallas(q.reshape(B * S, D), self.w_qkv, self.b_qkv)
            q_p, k_p, v_p = qkv[:, :D], qkv[:, D:2 * D], qkv[:, 2 * D:]
        else:
            q_p = linear_pallas(q.reshape(B * S, D), self.wq, self.bq)
            k_p = linear_pallas(k.reshape(B * S, D), self.wk, self.bk)
            v_p = linear_pallas(v.reshape(B * S, D), self.wv, self.bv)

        q4 = self._to_4d(q_p.reshape(B, S, D), B, S)
        k4 = self._to_4d(k_p.reshape(B, S, D), B, S)
        v4 = self._to_4d(v_p.reshape(B, S, D), B, S)

        # mask (B, 1, Sm, S), Sm in {1, S}  ->  additive f32 bias (B, Sm, S),
        # computed once (finite -1e30 avoids NaN for fully masked rows).
        if mask is None:
            bias = jnp.zeros((B, 1, S), jnp.float32)
        else:
            bias = jnp.where(mask == 0, jnp.float32(_NEG_INF),
                             jnp.float32(0.0))[:, 0]

        attn = flash_attention_pallas(q4, k4, v4, bias)      # (B, H, S, d_k)

        # (B, H, S, d_k) -> (B*S, d_model), then output projection.
        attn = attn.transpose(0, 2, 1, 3).reshape(B * S, self.d_model)
        out = linear_pallas(attn, self.wo, self.bo)
        return out.reshape(B, S, self.d_model)


# ----------------------------------------------------------------------------
# Pure-JAX reference for verification
# ----------------------------------------------------------------------------
def reference_forward(m: MultiHeadAttentionPallas, q, k, v, mask=None):
    B, S, D = q.shape

    def lin(x, w, b):
        return x @ w + b[0]

    query = m._to_4d(lin(q, m.wq, m.bq), B, S)
    key_ = m._to_4d(lin(k, m.wk, m.bk), B, S)
    value = m._to_4d(lin(v, m.wv, m.bv), B, S)
    s = jnp.einsum('bhqd,bhkd->bhqk', query, key_) / math.sqrt(m.d_k)
    if mask is not None:
        s = jnp.where(mask == 0, -jnp.inf, s)
    attn = jax.nn.softmax(s, axis=-1)
    out = jnp.einsum('bhqk,bhkd->bhqd', attn, value)
    out = out.transpose(0, 2, 1, 3).reshape(B, S, D)
    return lin(out, m.wo, m.bo)


if __name__ == "__main__":
    batch, seq, d_model, num_heads = 2, 8, 32, 4

    root = jax.random.PRNGKey(0)
    k_param, k_x, k_k, k_v = jax.random.split(root, 4)

    mha = MultiHeadAttentionPallas(d_model, num_heads, dropout=0.1, key=k_param)

    x = jax.random.normal(k_x, (batch, seq, d_model), jnp.float32)
    k_in = jax.random.normal(k_k, (batch, seq, d_model), jnp.float32)
    v_in = jax.random.normal(k_v, (batch, seq, d_model), jnp.float32)

    # Tolerance covers pl.reciprocal(approx=True) in the attention finalize;
    # the rest of the pipeline is exact f32.
    tol = dict(atol=1e-2, rtol=1e-2)

    # 1) self-attention + padding mask (B,1,1,S): fused-QKV path, Sm == 1.
    pad_mask = jnp.ones((batch, 1, 1, seq), jnp.int32)
    pad_mask = pad_mask.at[1, 0, 0, seq - 1].set(0)
    out_self = jax.block_until_ready(mha(x, x, x, pad_mask))
    ref_self = reference_forward(mha, x, x, x, pad_mask)
    assert out_self.shape == (batch, seq, d_model)
    assert jnp.allclose(out_self, ref_self, **tol), (
        "self-attn mismatch, max err "
        f"{jnp.max(jnp.abs(out_self - ref_self))}")

    # 2) cross-attention + causal mask (B,1,S,S): separate projections, Sm == S.
    causal = jnp.broadcast_to(
        jnp.tril(jnp.ones((seq, seq), jnp.int32))[None, None],
        (batch, 1, seq, seq))
    out_cross = jax.block_until_ready(mha(x, k_in, v_in, causal))
    ref_cross = reference_forward(mha, x, k_in, v_in, causal)
    assert out_cross.shape == (batch, seq, d_model)
    assert jnp.allclose(out_cross, ref_cross, **tol), (
        "cross-attn mismatch, max err "
        f"{jnp.max(jnp.abs(out_cross - ref_cross))}")

    print("KERNEL_OK")
</pallas_src>

<mosaic_0001>
module attributes {stable_mosaic.version = 11 : i64} {
  func.func @_linear_kernel(%arg0: i32, %arg1: i32, %arg2: i32, %arg3: memref<16x32xf32, #tpu.memory_space<vmem>>, %arg4: memref<32x96xf32, #tpu.memory_space<vmem>>, %arg5: memref<1x96xf32, #tpu.memory_space<vmem>>, %arg6: memref<16x96xf32, #tpu.memory_space<vmem>>, %arg7: memref<16x96xf32, #tpu.memory_space<vmem>>) attributes {dimension_semantics = [#tpu.dimension_semantics<parallel>, #tpu.dimension_semantics<parallel>, #tpu.dimension_semantics<arbitrary>], iteration_bounds = array<i64: 1, 1, 1>, scalar_prefetch = 0 : i64, scratch_operands = 1 : i64, tpu.core_type = #tpu.core_type<tc>, window_params = [{transform_indices = @transform_0, window_bounds = array<i64: 16, 32>}, {transform_indices = @transform_1, window_bounds = array<i64: 32, 96>}, {transform_indices = @transform_2, window_bounds = array<i64: 1, 96>}, {transform_indices = @transform_3, window_bounds = array<i64: 16, 96>}]} {
    %c0_i32 = arith.constant 0 : i32
    %0 = arith.cmpi eq, %arg2, %c0_i32 : i32
    %1 = arith.extui %0 : i1 to i32
    %c0_i32_0 = arith.constant 0 : i32
    %2 = arith.cmpi ne, %1, %c0_i32_0 : i32
    scf.if %2 {
      %cst_10 = arith.constant 0.000000e+00 : f32
      %12 = vector.broadcast %cst_10 : f32 to vector<16x96xf32>
      %c0_11 = arith.constant 0 : index
      %c0_12 = arith.constant 0 : index
      %13 = vector.load %arg7[%c0_11, %c0_12] : memref<16x96xf32, #tpu.memory_space<vmem>>, vector<16x96xf32>
      tpu.vector_store %arg7[%c0_11, %c0_12], %12 {strides = array<i32>} : memref<16x96xf32, #tpu.memory_space<vmem>>, vector<16x96xf32>,
    } else {
    }
    %c0 = arith.constant 0 : index
    %c0_1 = arith.constant 0 : index
    %3 = vector.load %arg7[%c0, %c0_1] : memref<16x96xf32, #tpu.memory_space<vmem>>, vector<16x96xf32>
    %c0_2 = arith.constant 0 : index
    %c0_3 = arith.constant 0 : index
    %4 = vector.load %arg3[%c0_2, %c0_3] : memref<16x32xf32, #tpu.memory_space<vmem>>, vector<16x32xf32>
    %c0_4 = arith.constant 0 : index
    %c0_5 = arith.constant 0 : index
    %5 = vector.load %arg4[%c0_4, %c0_5] : memref<32x96xf32, #tpu.memory_space<vmem>>, vector<32x96xf32>
    %cst = arith.constant dense<0.000000e+00> : vector<16x96xf32>
    %6 = tpu.matmul %4, %5, %cst {dimension_numbers = #tpu.dot_dimension_numbers<[1], [0], [0], [1], [0, 0, 1, 1], [], []>} : vector<16x32xf32>, vector<32x96xf32>, vector<16x96xf32> -> vector<16x96xf32>
    %7 = arith.addf %3, %6 : vector<16x96xf32>
    %c0_6 = arith.constant 0 : index
    %c0_7 = arith.constant 0 : index
    %8 = vector.load %arg7[%c0_6, %c0_7] : memref<16x96xf32, #tpu.memory_space<vmem>>, vector<16x96xf32>
    tpu.vector_store %arg7[%c0_6, %c0_7], %7 {strides = array<i32>} : memref<16x96xf32, #tpu.memory_space<vmem>>, vector<16x96xf32>,
    %c0_i32_8 = arith.constant 0 : i32
    %9 = arith.cmpi eq, %arg2, %c0_i32_8 : i32
    %10 = arith.extui %9 : i1 to i32
    %c0_i32_9 = arith.constant 0 : i32
    %11 = arith.cmpi ne, %10, %c0_i32_9 : i32
    scf.if %11 {
      %c0_10 = arith.constant 0 : index
      %c0_11 = arith.constant 0 : index
      %12 = vector.load %arg7[%c0_10, %c0_11] : memref<16x96xf32, #tpu.memory_space<vmem>>, vector<16x96xf32>
      %c0_12 = arith.constant 0 : index
      %c0_13 = arith.constant 0 : index
      %13 = vector.load %arg5[%c0_12, %c0_13] : memref<1x96xf32, #tpu.memory_space<vmem>>, vector<1x96xf32>
      %14 = vector.broadcast %13 : vector<1x96xf32> to vector<16x96xf32>
      %15 = arith.addf %12, %14 : vector<16x96xf32>
      %c0_14 = arith.constant 0 : index
      %c0_15 = arith.constant 0 : index
      %16 = vector.load %arg6[%c0_14, %c0_15] : memref<16x96xf32, #tpu.memory_space<vmem>>, vector<16x96xf32>
      tpu.vector_store %arg6[%c0_14, %c0_15], %15 {strides = array<i32>} : memref<16x96xf32, #tpu.memory_space<vmem>>, vector<16x96xf32>,
    } else {
    }
    return
  }
  func.func @transform_0(%arg0: i32, %arg1: i32, %arg2: i32) -> (i32, i32) {
    %c0_i32 = arith.constant 0 : i32
    return %arg0, %arg2 : i32, i32
  }
  func.func @transform_1(%arg0: i32, %arg1: i32, %arg2: i32) -> (i32, i32) {
    %c0_i32 = arith.constant 0 : i32
    return %arg2, %arg1 : i32, i32
  }
  func.func @transform_2(%arg0: i32, %arg1: i32, %arg2: i32) -> (i32, i32) {
    %c0_i32 = arith.constant 0 : i32
    %c0_i32_0 = arith.constant 0 : i32
    return %c0_i32, %arg1 : i32, i32
  }
  func.func @transform_3(%arg0: i32, %arg1: i32, %arg2: i32) -> (i32, i32) {
    %c0_i32 = arith.constant 0 : i32
    return %arg0, %arg1 : i32, i32
  }
}

</mosaic_0001>

<llo_original>
// kernel: tpu_custom_call.1
$region0: #{tpu_custom_call.1}
  #allocation0 [shape = 'u32[]', space=smem, size = 0x4, offset = 0x4, fixed_abs, tag = 'smem constant byte address 0x4 - core index']
  #allocation1 [shape = 'u32[144,128]{1,0:T(1,128)}', space=vmem, size = 0x12000, scoped, tag = 'internal scratch']
  #allocation2 [shape = 'f32[16,96]{1,0:T(8,128)}', space=vmem, size = 0x2000, scoped, tag = 'scratch operand']
  %s0 = inlined_call_operand.hbm [shape: f32[16,32], index: 0, kind: input, shape index: {}]
  %s1 = inlined_call_operand.hbm [shape: f32[32,96], index: 1, kind: input, shape index: {}]
  %s2 = inlined_call_operand.vmem [shape: f32[1,96], index: 2, kind: input, shape index: {}]
  %s3 = inlined_call_operand.hbm [shape: f32[16,96], index: 3, kind: output, shape index: {}]
  %s4 = sld [smem:[#allocation0]]
  $region38: #{tpu_custom_call.1} parent=0
    _
  %s6 = ssub.s32 1, %s4
  %s7 = scalar_select 0, %s6, %s4
  $region1: #{tpu_custom_call.1} parent=0
    #allocation3 [shape = 'u8[8192]{0}', space=vmem, size = 0x2000, scoped, tag = 'input window, operand 0, single buffered']
    #allocation4 [shape = 's32[1]{0}', space=sflag, size = 0x4, scoped, tag = 'scoped memory for tpu_custom_call.1']
    #allocation5 [shape = 's32[1]{0}', space=sflag, size = 0x4, scoped, tag = 'scoped memory for tpu_custom_call.1']
    #allocation6 [shape = 'u8[16384]{0}', space=vmem, size = 0x4000, scoped, tag = 'input window, operand 1, single buffered']
    #allocation7 [shape = 's32[1]{0}', space=sflag, size = 0x4, scoped, tag = 'scoped memory for tpu_custom_call.1']
    #allocation8 [shape = 'u8[8192]{0}', space=vmem, size = 0x2000, scoped, tag = 'output window, operand 0, single buffered']
    %8 = vsyncpa [#allocation4], 0
    %9 = vsyncpa [#allocation7], 0
    %10 = vsyncpa [#allocation5], 0
    // Predicated region
    $region2: #{tpu_custom_call.1} parent=1 // pred_check
      _
    $region3: #{tpu_custom_call.1} parent=1 // pred_check_branch
      %12 = sbr.rel (0) target = $region5
    $region4: #{tpu_custom_call.1} parent=1 // pred_region
      %s14 = ssub.s32 256, 256
      %15 = vsyncadd [#allocation4], %s14
      %s16 = sshll.u32 [#allocation3], 4
      %s17 = int_to_ptr.vmem [resolvable:$true] %s16
      %22 = dma.hbm_to_vmem [thread:$0]  %s0, 256, %s17, [#allocation4], 128, 128, 8
    $region5: #{tpu_custom_call.1} parent=1 // pred_fallthru
      _
    // Predicated region
    $region6: #{tpu_custom_call.1} parent=1 // pred_check
      _
    $region7: #{tpu_custom_call.1} parent=1 // pred_check_branch
      %24 = sbr.rel (0) target = $region9
    $region8: #{tpu_custom_call.1} parent=1 // pred_region
      %s26 = ssub.s32 512, 512
      %27 = vsyncadd [#allocation7], %s26
      %s28 = sshll.u32 [#allocation6], 4
      %s29 = int_to_ptr.vmem [resolvable:$true] %s28
      %34 = dma.hbm_to_vmem [thread:$0]  %s1, 512, %s29, [#allocation7], 128, 128, 8
    $region9: #{tpu_custom_call.1} parent=1 // pred_fallthru
      _
    // Predicated region
    $region10: #{tpu_custom_call.1} parent=1 // pred_check
      _
    $region11: #{tpu_custom_call.1} parent=1 // pred_check_branch
      %36 = sbr.rel (0) target = $region13
    $region12: #{tpu_custom_call.1} parent=1 // pred_region
      _
    $region13: #{tpu_custom_call.1} parent=1 // pred_fallthru
      _
    // Predicated region
    $region14: #{tpu_custom_call.1} parent=1 // pred_check
      _
    $region15: #{tpu_custom_call.1} parent=1 // pred_check_branch
      %38 = sbr.rel (0) target = $region17
    $region16: #{tpu_custom_call.1} parent=1 // pred_region
      %39 = dma.done [#allocation4], 256
    $region17: #{tpu_custom_call.1} parent=1 // pred_fallthru
      _
    // Predicated region
    $region18: #{tpu_custom_call.1} parent=1 // pred_check
      _
    $region19: #{tpu_custom_call.1} parent=1 // pred_check_branch
      %41 = sbr.rel (0) target = $region21
    $region20: #{tpu_custom_call.1} parent=1 // pred_region
      %42 = dma.done [#allocation7], 512
    $region21: #{tpu_custom_call.1} parent=1 // pred_fallthru
      _
    %p43 = scmp.eq.s32.totalorder 0, 0
    // Predicated region
    $region22: #{tpu_custom_call.1} parent=1 // pred_check
      %p44 = pneg %p43
    $region23: #{tpu_custom_call.1} parent=1 // pred_check_branch
      %46 = sbr.rel (%p44) target = $region25
    $region24: #{tpu_custom_call.1} parent=1 // pred_region
      %vm47 = vcmask 785408
      %48 = vst.msk [vmem:[#allocation2] sm:$0xff] %vm47, 0.0
      %49 = vst.msk [vmem:[#allocation2 + $0x8] sm:$0xff] %vm47, 0.0
    $region25: #{tpu_custom_call.1} parent=1 // pred_fallthru
      _
    %v50 = vld [vmem:[#allocation2] sm:$0xff]
    %v51 = vld [vmem:[#allocation2 + $0x8] sm:$0xff]
    %v52 = vld [vmem:[#allocation3] sm:$0xff]
    %v53 = vld [vmem:[#allocation3 + $0x8] sm:$0xff]
    %v54 = vld [vmem:[#allocation6] sm:$0xff]
    %v55 = vld [vmem:[#allocation6 + $0x8] sm:$0xff]
    %v56 = vld [vmem:[#allocation6 + $0x10] sm:$0xff]
    %v57 = vld [vmem:[#allocation6 + $0x18] sm:$0xff]
    %vm58 = vcmask 261120
    %v60 = vsel %vm58, %v52, 0
    %v63 = vsel %vm58, %v53, 0
    %65 = vmatprep.subr.mxu0 0.0
    %66 = vmatpush1.msra.mxu0 %v54
    %67 = vmatprep.subr.mxu0 0.0
    %68 = vmatpush1.msra.mxu0 %v55
    %69 = vmatprep.subr.mxu0 0.0
    %70 = vmatpush1.msra.mxu0 %v56
    %71 = vmatprep.subr.mxu0 0.0
    %72 = vmatpush1.msra.mxu0 %v57
    %73 = vmatprep.subr.mxu0 0.0
    %74 = vmatpush1.msra.mxu0 0.0
    %75 = vmatprep.subr.mxu0 0.0
    %76 = vmatpush1.msra.mxu0 0.0
    %77 = vmatprep.subr.mxu0 0.0
    %78 = vmatpush1.msra.mxu0 0.0
    %79 = vmatprep.subr.mxu0 0.0
    %80 = vmatpush1.msra.mxu0 0.0
    %81 = vmatprep.subr.mxu0 0.0
    %82 = vmatpush1.msra.mxu0 0.0
    %83 = vmatprep.subr.mxu0 0.0
    %84 = vmatpush1.msra.mxu0 0.0
    %85 = vmatprep.subr.mxu0 0.0
    %86 = vmatpush1.msra.mxu0 0.0
    %87 = vmatprep.subr.mxu0 0.0
    %88 = vmatpush1.msra.mxu0 0.0
    %89 = vmatprep.subr.mxu0 0.0
    %90 = vmatpush1.msra.mxu0 0.0
    %91 = vmatprep.subr.mxu0 0.0
    %92 = vmatpush1.msra.mxu0 0.0
    %93 = vmatprep.subr.mxu0 0.0
    %94 = vmatpush1.msra.mxu0 0.0
    %95 = vmatprep.subr.mxu0 0.0
    %96 = vmatpush1.msra.mxu0 0.0
    %97 = vmatprep.subr.mxu0 0.0
    %98 = vmatpush1.msra.mxu0 0.0
    %99 = vmatprep.subr.mxu0 0.0
    %100 = vmatpush1.msra.mxu0 0.0
    %101 = vmatprep.subr.mxu0 0.0
    %102 = vmatpush1.msra.mxu0 0.0
    %103 = vmatprep.subr.mxu0 0.0
    %104 = vmatpush1.msra.mxu0 0.0
    %105 = vmatprep.subr.mxu0 0.0
    %106 = vmatpush1.msra.mxu0 0.0
    %107 = vmatprep.subr.mxu0 0.0
    %108 = vmatpush1.msra.mxu0 0.0
    %109 = vmatprep.subr.mxu0 0.0
    %110 = vmatpush1.msra.mxu0 0.0
    %111 = vmatprep.subr.mxu0 0.0
    %112 = vmatpush1.msra.mxu0 0.0
    %113 = vmatprep.subr.mxu0 0.0
    %114 = vmatpush1.msra.mxu0 0.0
    %115 = vmatprep.subr.mxu0 0.0
    %116 = vmatpush1.msra.mxu0 0.0
    %117 = vmatprep.subr.mxu0 0.0
    %118 = vmatpush1.msra.mxu0 0.0
    %119 = vmatprep.subr.mxu0 0.0
    %120 = vmatpush1.msra.mxu0 0.0
    %121 = vmatprep.subr.mxu0 0.0
    %122 = vmatpush1.msra.mxu0 0.0
    %123 = vmatprep.subr.mxu0 0.0
    %124 = vmatpush1.msra.mxu0 0.0
    %125 = vmatprep.subr.mxu0 0.0
    %126 = vmatpush1.msra.mxu0 0.0
    %127 = vmatprep.subr.mxu0 0.0
    %128 = vmatpush1.msra.mxu0 0.0
    %129 = vmatprep.mubr.f32.mxu0 0.0
    %130 = vmatmul.mubr.f32.gmra.mrb[0].mxu0 %v60
    %v131 = vpop.f32.mrb[0].mxu0
    %v132 = vadd.f32 0.0, %v131
    %v133 = vpop.f32.mrb[0].mxu0
    %134 = vmatprep.mubr.f32.mxu0 0.0
    %135 = vmatmul.mubr.f32.gmra.mrb[0].mxu0 %v63
    %v136 = vpop.f32.mrb[0].mxu0
    %v137 = vadd.f32 0.0, %v136
    %v138 = vpop.f32.mrb[0].mxu0
    %139 = vdwg.mxu0
    %v140 = vadd.f32 %v50, %v132
    %v141 = vadd.f32 %v51, %v137
    %vm142 = vcmask 785408
    %143 = vst.msk [vmem:[#allocation2] sm:$0xff] %vm142, %v140
    %144 = vst.msk [vmem:[#allocation2 + $0x8] sm:$0xff] %vm142, %v141
    // Predicated region
    $region26: #{tpu_custom_call.1} parent=1 // pred_check
      %p145 = pneg %p43
    $region27: #{tpu_custom_call.1} parent=1 // pred_check_branch
      %147 = sbr.rel (%p145) target = $region29
    $region28: #{tpu_custom_call.1} parent=1 // pred_region
      %v148 = vld [vmem:[#allocation2] sm:$0xff]
      %v149 = vld [vmem:[#allocation2 + $0x8] sm:$0xff]
      %v150 = vld [vmem:[%s2] sm:$0x1]
      %v152 = vlaneseq
      %v153 = vshrl.u32 %v152, 7
      %v154 = vsub.s32 0, %v153
      %v155 = vrot.slane %v150, %v154
      %v157 = vadd.f32 %v148, %v155
      %v158 = vadd.f32 %v149, %v155
      %159 = vst.msk [vmem:[#allocation8] sm:$0xff] %vm142, %v157
      %160 = vst.msk [vmem:[#allocation8 + $0x8] sm:$0xff] %vm142, %v158
    $region29: #{tpu_custom_call.1} parent=1 // pred_fallthru
      _
    // Predicated region
    $region30: #{tpu_custom_call.1} parent=1 // pred_check
      _
    $region31: #{tpu_custom_call.1} parent=1 // pred_check_branch
      %162 = sbr.rel (0) target = $region33
    $region32: #{tpu_custom_call.1} parent=1 // pred_region
      %s164 = ssub.s32 256, 256
      %165 = vsyncadd [#allocation5], %s164
      %s166 = sshll.u32 [#allocation8], 4
      %s167 = int_to_ptr.vmem [resolvable:$true] %s166
      %172 = dma.vmem_to_hbm [thread:$0]  %s167, 256, %s3, [#allocation5], 128, 128, 8
    $region33: #{tpu_custom_call.1} parent=1 // pred_fallthru
      _
    // Predicated region
    $region34: #{tpu_custom_call.1} parent=1 // pred_check
      _
    $region35: #{tpu_custom_call.1} parent=1 // pred_check_branch
      %174 = sbr.rel (0) target = $region37
    $region36: #{tpu_custom_call.1} parent=1 // pred_region
      %175 = dma.done [#allocation5], 256
    $region37: #{tpu_custom_call.1} parent=1 // pred_fallthru
      _
    %176 = vsyncpa [#allocation4], 1
    %177 = vsyncpa [#allocation7], 1
    %178 = vsyncpa [#allocation5], 1

</llo_original>
